<compile_context>
chip_gen: v6e
topology: v6e:2x2x1
jax: 0.10.0
libtpu: 0.0.40
codegen_flags: <defaults>
</compile_context>

<pallas_src>
import jax
import jax.numpy as jnp
from jax.experimental import pallas as pl
from jax.experimental.pallas import tpu as pltpu


def attention_kernel(x_ref, w1_ref, b1_ref, w2_ref, b2_ref, out_ref):
    # x_ref : (TB, S, D)  batch tile (f32 or bf16)
    # w1_ref: (D, A)      first Linear weight (same dtype as x)
    # b1_ref: (1, A) f32  first Linear bias
    # w2_ref: (1, A) f32  second Linear weight as a row vector
    # b2_ref: (1, 1) f32  second Linear bias
    # out_ref: (TB, D) f32
    TB, S, D = x_ref.shape
    A = w1_ref.shape[1]

    x = x_ref[...]                                    # (TB, S, D)
    x2d = x.reshape(TB * S, D)                        # fold batch into MXU M-dim

    # Hidden projection on the MXU (f32 accumulate), tanh in f32 (EUP).
    h = jnp.tanh(
        jnp.dot(x2d, w1_ref[...], preferred_element_type=jnp.float32)
        + b1_ref[...]
    )                                                 # (TB*S, A) f32

    # Width-1 score projection: VPU multiply + lane reduce (keeps the MXU free,
    # avoids lane-sparse (S, 1) vregs).
    h3 = h.reshape(TB, S, A)
    scores = jnp.sum(h3 * w2_ref[...], axis=-1) + b2_ref[...]   # (TB, S) f32

    # Softmax over the sequence axis (lane axis) — dense lane reductions.
    m = jnp.max(scores, axis=-1, keepdims=True)       # (TB, 1)
    e = jnp.exp(scores - m)                           # (TB, S)
    denom = jnp.sum(e, axis=-1, keepdims=True)        # (TB, 1)
    weights = e * pl.reciprocal(denom, approx=True)   # (TB, S)

    # Context: batched (1, S) @ (S, D) matmul on the MXU with f32 accumulation.
    w3 = weights.astype(x.dtype).reshape(TB, 1, S)
    ctx = jnp.einsum("bos,bsd->bod", w3, x,
                     preferred_element_type=jnp.float32)        # (TB, 1, D)
    out_ref[...] = ctx.reshape(TB, D).astype(out_ref.dtype)


def attention_forward(x, w1, b1, w2, b2, *, block_b=8, compute_dtype=None):
    """Pallas forward of the PyTorch Attention module.

    x : (B, S, D) float32
    w1: (D, A)   b1: (A,)   w2: (A, 1) or (A,)   b2: (1,) or scalar
    Returns the context vector of shape (B, D) in float32.
    """
    B, S, D = x.shape
    A = w1.shape[1]

    # Optional low-precision matmul inputs (kernel accumulates in f32).
    if compute_dtype is not None:
        x = x.astype(compute_dtype)
        w1 = w1.astype(compute_dtype)

    b1r = jnp.asarray(b1, jnp.float32).reshape(1, A)
    w2r = jnp.asarray(w2, jnp.float32).reshape(1, A)
    b2r = jnp.asarray(b2, jnp.float32).reshape(1, 1)

    # Batch tile: a multiple of 8 (sublane) unless one block covers all of B.
    if B <= block_b:
        tb = B
    else:
        assert block_b % 8 == 0, "block_b must be a multiple of 8"
        tb = block_b
    b_pad = -(-B // tb) * tb
    if b_pad != B:
        # Zero rows are harmless: their softmax is uniform and their context
        # is exactly zero; they are sliced off below.
        x = jnp.pad(x, ((0, b_pad - B), (0, 0), (0, 0)))

    grid = (b_pad // tb,)
    out = pl.pallas_call(
        attention_kernel,
        out_shape=jax.ShapeDtypeStruct((b_pad, D), jnp.float32),
        grid_spec=pltpu.PrefetchScalarGridSpec(
            num_scalar_prefetch=0,
            grid=grid,
            in_specs=[
                pl.BlockSpec((tb, S, D), lambda b: (b, 0, 0)),   # x batch tile
                pl.BlockSpec((D, A), lambda b: (0, 0)),          # w1 (resident)
                pl.BlockSpec((1, A), lambda b: (0, 0)),          # b1
                pl.BlockSpec((1, A), lambda b: (0, 0)),          # w2 row
                pl.BlockSpec((1, 1), lambda b: (0, 0)),          # b2
            ],
            out_specs=pl.BlockSpec((tb, D), lambda b: (b, 0)),
        ),
        compiler_params=pltpu.CompilerParams(
            dimension_semantics=("parallel",),
        ),
    )(x, w1, b1r, w2r, b2r)
    return out[:B]


def reference_forward(x, w1, b1, w2, b2):
    """Pure-JAX reference matching the PyTorch forward (f32)."""
    h = jnp.tanh(jnp.einsum("bsd,da->bsa", x, w1) + b1)        # (B, S, A)
    scores = jnp.einsum("bsa,ao->bso", h, w2.reshape(-1, 1)) + b2  # (B, S, 1)
    weights = jax.nn.softmax(scores, axis=1)                   # (B, S, 1)
    return jnp.sum(x * weights, axis=1)                        # (B, D)


if __name__ == "__main__":
    # Small shapes consistent with the module's forward contract.
    B, S, D, A = 16, 8, 32, 16

    key = jax.random.PRNGKey(0)
    kx, kw1, kb1, kw2, kb2 = jax.random.split(key, 5)

    x = jax.random.normal(kx, (B, S, D), dtype=jnp.float32)

    # Deterministic parameter init (nn.Linear-style uniform bounds).
    lim1 = 1.0 / (D ** 0.5)
    lim2 = 1.0 / (A ** 0.5)
    w1 = jax.random.uniform(kw1, (D, A), jnp.float32, -lim1, lim1)
    b1 = jax.random.uniform(kb1, (A,), jnp.float32, -lim1, lim1)
    w2 = jax.random.uniform(kw2, (A, 1), jnp.float32, -lim2, lim2)
    b2 = jax.random.uniform(kb2, (1,), jnp.float32, -lim2, lim2)

    ref = reference_forward(x, w1, b1, w2, b2)

    # f32 path (tight check; approx reciprocal => small slack).
    out_f32 = attention_forward(x, w1, b1, w2, b2, block_b=8)
    jax.block_until_ready(out_f32)
    assert out_f32.shape == (B, D)
    assert jnp.allclose(out_f32, ref, atol=5e-3, rtol=5e-3), "f32 mismatch"

    # bf16 matmul inputs (halves HBM traffic for the memory-bound kernel).
    out_bf16 = attention_forward(x, w1, b1, w2, b2, block_b=8,
                                 compute_dtype=jnp.bfloat16)
    jax.block_until_ready(out_bf16)
    assert jnp.allclose(out_bf16, ref, atol=5e-2, rtol=5e-2), "bf16 mismatch"

    # Non-multiple-of-tile batch exercises the padding path.
    out_small = attention_forward(x[:5], w1, b1, w2, b2, block_b=8)
    jax.block_until_ready(out_small)
    assert jnp.allclose(out_small, ref[:5], atol=5e-3, rtol=5e-3), "pad mismatch"

    print("KERNEL_OK")
</pallas_src>

<mosaic_0001>
module attributes {stable_mosaic.version = 11 : i64} {
  func.func @attention_kernel(%arg0: i32, %arg1: memref<8x8x32xf32, #tpu.memory_space<vmem>>, %arg2: memref<32x16xf32, #tpu.memory_space<vmem>>, %arg3: memref<1x16xf32, #tpu.memory_space<vmem>>, %arg4: memref<1x16xf32, #tpu.memory_space<vmem>>, %arg5: memref<1x1xf32, #tpu.memory_space<vmem>>, %arg6: memref<8x32xf32, #tpu.memory_space<vmem>>) attributes {dimension_semantics = [#tpu.dimension_semantics<parallel>], iteration_bounds = array<i64: 2>, scalar_prefetch = 0 : i64, scratch_operands = 0 : i64, tpu.core_type = #tpu.core_type<tc>, window_params = [{transform_indices = @transform_0, window_bounds = array<i64: 8, 8, 32>}, {pipeline_mode = #tpu.pipeline_mode<synchronous>, transform_indices = @transform_1, window_bounds = array<i64: 32, 16>}, {pipeline_mode = #tpu.pipeline_mode<synchronous>, transform_indices = @transform_2, window_bounds = array<i64: 1, 16>}, {pipeline_mode = #tpu.pipeline_mode<synchronous>, transform_indices = @transform_3, window_bounds = array<i64: 1, 16>}, {pipeline_mode = #tpu.pipeline_mode<synchronous>, transform_indices = @transform_4, window_bounds = array<i64: 1, 1>}, {transform_indices = @transform_5, window_bounds = array<i64: 8, 32>}]} {
    %c0 = arith.constant 0 : index
    %c0_0 = arith.constant 0 : index
    %c0_1 = arith.constant 0 : index
    %0 = vector.load %arg1[%c0, %c0_0, %c0_1] : memref<8x8x32xf32, #tpu.memory_space<vmem>>, vector<8x8x32xf32>
    %1 = vector.shape_cast %0 : vector<8x8x32xf32> to vector<64x32xf32>
    %c0_2 = arith.constant 0 : index
    %c0_3 = arith.constant 0 : index
    %2 = vector.load %arg2[%c0_2, %c0_3] : memref<32x16xf32, #tpu.memory_space<vmem>>, vector<32x16xf32>
    %cst = arith.constant dense<0.000000e+00> : vector<64x16xf32>
    %3 = tpu.matmul %1, %2, %cst {dimension_numbers = #tpu.dot_dimension_numbers<[1], [0], [0], [1], [0, 0, 1, 1], [], []>} : vector<64x32xf32>, vector<32x16xf32>, vector<64x16xf32> -> vector<64x16xf32>
    %c0_4 = arith.constant 0 : index
    %c0_5 = arith.constant 0 : index
    %4 = vector.load %arg3[%c0_4, %c0_5] : memref<1x16xf32, #tpu.memory_space<vmem>>, vector<1x16xf32>
    %5 = vector.broadcast %4 : vector<1x16xf32> to vector<64x16xf32>
    %6 = arith.addf %3, %5 : vector<64x16xf32>
    %7 = math.tanh %6 : vector<64x16xf32>
    %8 = vector.shape_cast %7 : vector<64x16xf32> to vector<8x8x16xf32>
    %c0_6 = arith.constant 0 : index
    %c0_7 = arith.constant 0 : index
    %9 = vector.load %arg4[%c0_6, %c0_7] : memref<1x16xf32, #tpu.memory_space<vmem>>, vector<1x16xf32>
    %10 = vector.shape_cast %9 : vector<1x16xf32> to vector<1x1x16xf32>
    %11 = vector.broadcast %10 : vector<1x1x16xf32> to vector<8x8x16xf32>
    %12 = arith.mulf %8, %11 : vector<8x8x16xf32>
    %cst_8 = arith.constant dense<0.000000e+00> : vector<8x8xf32>
    %13 = vector.multi_reduction <add>, %12, %cst_8 [2] : vector<8x8x16xf32> to vector<8x8xf32>
    %c0_9 = arith.constant 0 : index
    %c0_10 = arith.constant 0 : index
    %14 = vector.load %arg5[%c0_9, %c0_10] : memref<1x1xf32, #tpu.memory_space<vmem>>, vector<1x1xf32>
    %15 = vector.broadcast %14 : vector<1x1xf32> to vector<8x8xf32>
    %16 = arith.addf %13, %15 : vector<8x8xf32>
    %cst_11 = arith.constant dense<0xFF800000> : vector<8xf32>
    %17 = vector.multi_reduction <maximumf>, %16, %cst_11 [1] : vector<8x8xf32> to vector<8xf32>
    %18 = vector.shape_cast %17 : vector<8xf32> to vector<8x1xf32>
    %19 = vector.broadcast %18 : vector<8x1xf32> to vector<8x8xf32>
    %20 = arith.subf %16, %19 : vector<8x8xf32>
    %21 = math.exp %20 : vector<8x8xf32>
    %cst_12 = arith.constant dense<0.000000e+00> : vector<8xf32>
    %22 = vector.multi_reduction <add>, %21, %cst_12 [1] : vector<8x8xf32> to vector<8xf32>
    %23 = vector.shape_cast %22 : vector<8xf32> to vector<8x1xf32>
    %24 = tpu.reciprocal %23 {approx = true} : vector<8x1xf32> -> vector<8x1xf32>
    %25 = vector.broadcast %24 : vector<8x1xf32> to vector<8x8xf32>
    %26 = arith.mulf %21, %25 : vector<8x8xf32>
    %27 = vector.shape_cast %26 : vector<8x8xf32> to vector<8x1x8xf32>
    "tpu.trace_start"() <{level = 10 : i32, message = "bos,bsd->bod"}> : () -> ()
    %cst_13 = arith.constant dense<0.000000e+00> : vector<8x1x32xf32>
    %28 = tpu.matmul %27, %0, %cst_13 {dimension_numbers = #tpu.dot_dimension_numbers<[2], [1], [1], [2], [0, 0, 0, 1, 1, 2], [0], [0]>} : vector<8x1x8xf32>, vector<8x8x32xf32>, vector<8x1x32xf32> -> vector<8x1x32xf32>
    "tpu.trace_stop"() : () -> ()
    %29 = vector.shape_cast %28 : vector<8x1x32xf32> to vector<8x32xf32>
    %c0_14 = arith.constant 0 : index
    %c0_15 = arith.constant 0 : index
    %30 = vector.load %arg6[%c0_14, %c0_15] : memref<8x32xf32, #tpu.memory_space<vmem>>, vector<8x32xf32>
    tpu.vector_store %arg6[%c0_14, %c0_15], %29 {strides = array<i32>} : memref<8x32xf32, #tpu.memory_space<vmem>>, vector<8x32xf32>,
    return
  }
  func.func @transform_0(%arg0: i32) -> (i32, i32, i32) {
    %c0_i32 = arith.constant 0 : i32
    %c0_i32_0 = arith.constant 0 : i32
    %c0_i32_1 = arith.constant 0 : i32
    return %arg0, %c0_i32, %c0_i32_0 : i32, i32, i32
  }
  func.func @transform_1(%arg0: i32) -> (i32, i32) {
    %c0_i32 = arith.constant 0 : i32
    %c0_i32_0 = arith.constant 0 : i32
    %c0_i32_1 = arith.constant 0 : i32
    return %c0_i32, %c0_i32_0 : i32, i32
  }
  func.func @transform_2(%arg0: i32) -> (i32, i32) {
    %c0_i32 = arith.constant 0 : i32
    %c0_i32_0 = arith.constant 0 : i32
    %c0_i32_1 = arith.constant 0 : i32
    return %c0_i32, %c0_i32_0 : i32, i32
  }
  func.func @transform_3(%arg0: i32) -> (i32, i32) {
    %c0_i32 = arith.constant 0 : i32
    %c0_i32_0 = arith.constant 0 : i32
    %c0_i32_1 = arith.constant 0 : i32
    return %c0_i32, %c0_i32_0 : i32, i32
  }
  func.func @transform_4(%arg0: i32) -> (i32, i32) {
    %c0_i32 = arith.constant 0 : i32
    %c0_i32_0 = arith.constant 0 : i32
    %c0_i32_1 = arith.constant 0 : i32
    return %c0_i32, %c0_i32_0 : i32, i32
  }
  func.func @transform_5(%arg0: i32) -> (i32, i32) {
    %c0_i32 = arith.constant 0 : i32
    %c0_i32_0 = arith.constant 0 : i32
    return %arg0, %c0_i32 : i32, i32
  }
}

</mosaic_0001>

<llo_original>
// kernel: tpu_custom_call.1
$region0: #{tpu_custom_call.1}
  #allocation0 [shape = 'u32[]', space=smem, size = 0x4, offset = 0x4, fixed_abs, tag = 'smem constant byte address 0x4 - core index']
  #allocation1 [shape = 'u32[144,128]{1,0:T(1,128)}', space=vmem, size = 0x12000, scoped, tag = 'internal scratch']
  #allocation2 [shape = 'f32[1,1]{1,0:T(1,128)S(1)}', space=vmem, size = 0x200, scoped, tag = 'scoped memory for tpu_custom_call.1']
  %s0 = inlined_call_operand.hbm [shape: f32[16,8,32], index: 0, kind: input, shape index: {}]
  %s1 = inlined_call_operand.vmem [shape: f32[32,16], index: 1, kind: input, shape index: {}]
  %s2 = inlined_call_operand.vmem [shape: f32[1,16], index: 2, kind: input, shape index: {}]
  %s3 = inlined_call_operand.vmem [shape: f32[1,16], index: 3, kind: input, shape index: {}]
  %s4 = inlined_call_operand.<no memory space> [shape: f32[1,1], index: 4, kind: input, shape index: {}]
  %s5 = inlined_call_operand.hbm [shape: f32[16,32], index: 5, kind: output, shape index: {}]
  %s6 = sld [smem:[#allocation0]]
  $region57: #{tpu_custom_call.1} parent=0
    _
  %s8 = ssub.s32 1, %s6
  %s9 = scalar_select 0, %s8, %s6
  %v10 = vstv %s4
  %11 = vst [vmem:[#allocation2] sm:$0x1] %v10
  $region1: #{tpu_custom_call.1} parent=0
    #allocation3 [shape = 'u8[65536]{0}', space=vmem, size = 0x10000, scoped, tag = 'input window, operand 0']
    #allocation4 [shape = 's32[2]{0}', space=sflag, size = 0x8, scoped, tag = 'scoped memory for tpu_custom_call.1']
    #allocation5 [shape = 's32[2]{0}', space=sflag, size = 0x8, scoped, tag = 'scoped memory for tpu_custom_call.1']
    #allocation6 [shape = 'u8[8192]{0}', space=vmem, size = 0x2000, scoped, tag = 'output window, operand 0']
    %12 = vsyncpa [#allocation4], 0
    %s13 = scalar_lea.sflag [#allocation4], 1
    %14 = vsyncpa %s13, 0
    %15 = vsyncpa [#allocation5], 0
    %s16 = scalar_lea.sflag [#allocation5], 1
    %17 = vsyncpa %s16, 0
    loop: start=0, step=1, limit=4
    $region2: #{tpu_custom_call.1} parent=1 // loop_pre_header
      _
    $region3: #{tpu_custom_call.1} parent=1 // loop_header
      %s19 = sphi 0, %s23
      %p20 = scmp.ge.s32.totalorder %s19, 4
      %s29 = sphi 0, %s31
      %s32 = sphi 0, %s29
      %s33 = sphi 0, %s32
      %s49 = sphi 0, %s33
      %s53 = sphi 0, %s53
      %s55 = sphi 0, %s53
      %s56 = sphi 0, %s55
      %s70 = sphi 0, %s56
      %s74 = sphi 0, %s74
      %s76 = sphi 0, %s74
      %s77 = sphi 0, %s76
      %s91 = sphi 0, %s77
      %s95 = sphi 0, %s95
      %s97 = sphi 0, %s95
      %s98 = sphi 0, %s97
      %s112 = sphi 0, %s98
      %s116 = sphi 0, %s116
      %s118 = sphi 0, %s116
      %s119 = sphi 0, %s118
      %s133 = sphi 0, %s119
      %s139 = sphi 0, %s141
      %s142 = sphi 0, %s139
      %s143 = sphi 0, %s142
      %s159 = sphi 0, %s143
    $region4: #{tpu_custom_call.1} parent=1 // loop_header_branch
      %22 = sbr.rel (%p20) target = $region8
    $region5: #{tpu_custom_call.1} parent=1 // loop_body
      %s24 = ssub.s32 %s19, 1
      %s25 = ssub.s32 %s19, 2
      %s26 = sadd.s32 %s19, 1
      %s27 = ssub.s32 %s19, %s26
      %p28 = scmp.eq.s32.totalorder %s27, 0
      %s30 = sadd.s32 %s29, 1
      %s31 = scalar_select %p28, %s29, %s30
      %p34 = pneg %p28
      %p35 = scmp.eq.s32.totalorder %s19, 1
      %p36 = por %p34, %p35
      %p37 = scmp.ne.s32.totalorder %s29, %s32
      %p38 = scmp.eq.s32.totalorder %s19, 0
      %p39 = por %p37, %p38
      %p40 = scmp.ne.s32.totalorder %s29, %s32
      %p41 = scmp.eq.s32.totalorder %s24, 1
      %p42 = por %p40, %p41
      %p43 = scmp.ne.s32.totalorder %s32, %s33
      %p44 = scmp.eq.s32.totalorder %s24, 0
      %p45 = por %p43, %p44
      %p46 = scmp.ne.s32.totalorder %s32, %s33
      %p47 = scmp.eq.s32.totalorder %s25, 1
      %p48 = por %p46, %p47
      %p50 = scmp.ne.s32.totalorder %s33, %s49
      %p51 = scmp.eq.s32.totalorder %s25, 0
      %p52 = por %p50, %p51
      %s54 = sadd.s32 %s53, 1
      %p57 = scmp.eq.s32.totalorder %s19, 1
      %p58 = scmp.ne.s32.totalorder %s53, %s55
      %p59 = scmp.eq.s32.totalorder %s19, 0
      %p60 = por %p58, %p59
      %p61 = scmp.ne.s32.totalorder %s53, %s55
      %p62 = scmp.eq.s32.totalorder %s24, 1
      %p63 = por %p61, %p62
      %p64 = scmp.ne.s32.totalorder %s55, %s56
      %p65 = scmp.eq.s32.totalorder %s24, 0
      %p66 = por %p64, %p65
      %p67 = scmp.ne.s32.totalorder %s55, %s56
      %p68 = scmp.eq.s32.totalorder %s25, 1
      %p69 = por %p67, %p68
      %p71 = scmp.ne.s32.totalorder %s56, %s70
      %p72 = scmp.eq.s32.totalorder %s25, 0
      %p73 = por %p71, %p72
      %s75 = sadd.s32 %s74, 1
      %p78 = scmp.eq.s32.totalorder %s19, 1
      %p79 = scmp.ne.s32.totalorder %s74, %s76
      %p80 = scmp.eq.s32.totalorder %s19, 0
      %p81 = por %p79, %p80
      %p82 = scmp.ne.s32.totalorder %s74, %s76
      %p83 = scmp.eq.s32.totalorder %s24, 1
      %p84 = por %p82, %p83
      %p85 = scmp.ne.s32.totalorder %s76, %s77
      %p86 = scmp.eq.s32.totalorder %s24, 0
      %p87 = por %p85, %p86
      %p88 = scmp.ne.s32.totalorder %s76, %s77
      %p89 = scmp.eq.s32.totalorder %s25, 1
      %p90 = por %p88, %p89
      %p92 = scmp.ne.s32.totalorder %s77, %s91
      %p93 = scmp.eq.s32.totalorder %s25, 0
      %p94 = por %p92, %p93
      %s96 = sadd.s32 %s95, 1
      %p99 = scmp.eq.s32.totalorder %s19, 1
      %p100 = scmp.ne.s32.totalorder %s95, %s97
      %p101 = scmp.eq.s32.totalorder %s19, 0
      %p102 = por %p100, %p101
      %p103 = scmp.ne.s32.totalorder %s95, %s97
      %p104 = scmp.eq.s32.totalorder %s24, 1
      %p105 = por %p103, %p104
      %p106 = scmp.ne.s32.totalorder %s97, %s98
      %p107 = scmp.eq.s32.totalorder %s24, 0
      %p108 = por %p106, %p107
      %p109 = scmp.ne.s32.totalorder %s97, %s98
      %p110 = scmp.eq.s32.totalorder %s25, 1
      %p111 = por %p109, %p110
      %p113 = scmp.ne.s32.totalorder %s98, %s112
      %p114 = scmp.eq.s32.totalorder %s25, 0
      %p115 = por %p113, %p114
      %s117 = sadd.s32 %s116, 1
      %p120 = scmp.eq.s32.totalorder %s19, 1
      %p121 = scmp.ne.s32.totalorder %s116, %s118
      %p122 = scmp.eq.s32.totalorder %s19, 0
      %p123 = por %p121, %p122
      %p124 = scmp.ne.s32.totalorder %s116, %s118
      %p125 = scmp.eq.s32.totalorder %s24, 1
      %p126 = por %p124, %p125
      %p127 = scmp.ne.s32.totalorder %s118, %s119
      %p128 = scmp.eq.s32.totalorder %s24, 0
      %p129 = por %p127, %p128
      %p130 = scmp.ne.s32.totalorder %s118, %s119
      %p131 = scmp.eq.s32.totalorder %s25, 1
      %p132 = por %p130, %p131
      %p134 = scmp.ne.s32.totalorder %s119, %s133
      %p135 = scmp.eq.s32.totalorder %s25, 0
      %p136 = por %p134, %p135
      %s137 = ssub.s32 %s19, %s26
      %p138 = scmp.eq.s32.totalorder %s137, 0
      %s140 = sadd.s32 %s139, 1
      %s141 = scalar_select %p138, %s139, %s140
      %p144 = pneg %p138
      %p145 = scmp.eq.s32.totalorder %s19, 1
      %p146 = por %p144, %p145
      %p147 = scmp.ne.s32.totalorder %s139, %s142
      %p148 = scmp.eq.s32.totalorder %s19, 0
      %p149 = por %p147, %p148
      %p150 = scmp.ne.s32.totalorder %s139, %s142
      %p151 = scmp.eq.s32.totalorder %s24, 1
      %p152 = por %p150, %p151
      %p153 = scmp.ne.s32.totalorder %s142, %s143
      %p154 = scmp.eq.s32.totalorder %s24, 0
      %p155 = por %p153, %p154
      %p156 = scmp.ne.s32.totalorder %s142, %s143
      %p157 = scmp.eq.s32.totalorder %s25, 1
      %p158 = por %p156, %p157
      %p160 = scmp.ne.s32.totalorder %s143, %s159
      %p161 = scmp.eq.s32.totalorder %s25, 0
      %p162 = por %p160, %p161
      %p163 = scmp.le.s32.totalorder 1, %s19
      %p164 = scmp.lt.s32.totalorder %s19, 3
      %p165 = pnand %p163, %p164
      %p166 = pneg %p165
      // Predicated region
      $region9: #{tpu_custom_call.1} parent=5 // pred_check
        _
      $region10: #{tpu_custom_call.1} parent=5 // pred_check_branch
        %168 = sbr.rel (%p165) target = $region12
      $region11: #{tpu_custom_call.1} parent=5 // pred_region
        %s169 = ssub.s32 %s19, 1
        // Predicated region
        $region13: #{tpu_custom_call.1} parent=11 // pred_check
          %p170 = pneg %p66
        $region14: #{tpu_custom_call.1} parent=11 // pred_check_branch
          %172 = sbr.rel (%p170) target = $region16
        $region15: #{tpu_custom_call.1} parent=11 // pred_region
          _
        $region16: #{tpu_custom_call.1} parent=11 // pred_fallthru
          _
        // Predicated region
        $region17: #{tpu_custom_call.1} parent=11 // pred_check
          %p173 = pneg %p87
        $region18: #{tpu_custom_call.1} parent=11 // pred_check_branch
          %175 = sbr.rel (%p173) target = $region20
        $region19: #{tpu_custom_call.1} parent=11 // pred_region
          _
        $region20: #{tpu_custom_call.1} parent=11 // pred_fallthru
          _
        // Predicated region
        $region21: #{tpu_custom_call.1} parent=11 // pred_check
          %p176 = pneg %p108
        $region22: #{tpu_custom_call.1} parent=11 // pred_check_branch
          %178 = sbr.rel (%p176) target = $region24
        $region23: #{tpu_custom_call.1} parent=11 // pred_region
          _
        $region24: #{tpu_custom_call.1} parent=11 // pred_fallthru
          _
        // Predicated region
        $region25: #{tpu_custom_call.1} parent=11 // pred_check
          %p179 = pneg %p129
        $region26: #{tpu_custom_call.1} parent=11 // pred_check_branch
          %181 = sbr.rel (%p179) target = $region28
        $region27: #{tpu_custom_call.1} parent=11 // pred_region
          _
        $region28: #{tpu_custom_call.1} parent=11 // pred_fallthru
          _
      $region12: #{tpu_custom_call.1} parent=5 // pred_fallthru
        _
      %p182 = scmp.lt.s32.totalorder %s19, 2
      // Predicated region
      $region29: #{tpu_custom_call.1} parent=5 // pred_check
        %p183 = pneg %p182
      $region30: #{tpu_custom_call.1} parent=5 // pred_check_branch
        %185 = sbr.rel (%p183) target = $region32
      $region31: #{tpu_custom_call.1} parent=5 // pred_region
        // Predicated region
        $region33: #{tpu_custom_call.1} parent=31 // pred_check
          %p186 = pneg %p39
        $region34: #{tpu_custom_call.1} parent=31 // pred_check_branch
          %188 = sbr.rel (%p186) target = $region36
        $region35: #{tpu_custom_call.1} parent=31 // pred_region
          %s189 = sand.u32 %s29, 1
          %s190 = scalar_lea.sflag [#allocation4], %s189
          %s191 = sand.u32 %s29, 1
          %s192 = smul.addr %s191, 64
          %s193 = scalar_lea.vmem [#allocation3], %s192
          %s194 = smul.u32 8, %s19
          %s196 = ssub.s32 1024, 1024
          %197 = vsyncadd %s190, %s196
          %s198 = smul.addr %s194, 128
          %s199 = scalar_lea.hbm %s0, %s198
          %s200 = sshll.u32 %s193, 4
          %s201 = int_to_ptr.vmem [resolvable:$true] %s200
          %206 = dma.hbm_to_vmem [thread:$0]  %s199, 1024, %s201, %s190, 128, 128, 8
        $region36: #{tpu_custom_call.1} parent=31 // pred_fallthru
          _
      $region32: #{tpu_custom_call.1} parent=5 // pred_fallthru
        _
      %p207 = scmp.le.s32.totalorder 1, %s19
      %p208 = scmp.lt.s32.totalorder %s19, 3
      %p209 = pnand %p207, %p208
      %p210 = pneg %p209
      // Predicated region
      $region37: #{tpu_custom_call.1} parent=5 // pred_check
        _
      $region38: #{tpu_custom_call.1} parent=5 // pred_check_branch
        %212 = sbr.rel (%p209) target = $region40
      $region39: #{tpu_custom_call.1} parent=5 // pred_region
        %s213 = ssub.s32 %s19, 1
        %s214 = sand.u32 %s32, 1
        %s215 = scalar_lea.sflag [#allocation4], %s214
        %s216 = sand.u32 %s32, 1
        %s217 = smul.addr %s216, 64
        %s218 = scalar_lea.vmem [#allocation3], %s217
        // Predicated region
        $region41: #{tpu_custom_call.1} parent=39 // pred_check
          %p219 = pneg %p45
        $region42: #{tpu_custom_call.1} parent=39 // pred_check_branch
          %221 = sbr.rel (%p219) target = $region44
        $region43: #{tpu_custom_call.1} parent=39 // pred_region
          %222 = dma.done %s215, 1024
        $region44: #{tpu_custom_call.1} parent=39 // pred_fallthru
          _
        %s223 = sand.u32 %s32, 1
        %s224 = scalar_lea.sflag [#allocation4], %s223
        %s225 = sand.u32 %s32, 1
        %s226 = smul.addr %s225, 64
        %s227 = scalar_lea.vmem [#allocation3], %s226
        %p228 = pneg %p45
        %p229 = pneg %p42
        %p230 = pneg %p66
        %p231 = pneg %p63
        %p232 = pneg %p87
        %p233 = pneg %p84
        %p234 = pneg %p108
        %p235 = pneg %p105
        %p236 = pneg %p129
        %p237 = pneg %p126
        %p238 = pneg %p155
        %p239 = pneg %p152
        %s240 = sand.u32 %s142, 1
        %s241 = scalar_lea.sflag [#allocation5], %s240
        %s242 = sand.u32 %s142, 1
        %s243 = smul.addr %s242, 8
        %s244 = scalar_lea.vmem [#allocation6], %s243
        %s245 = smul.u32 8, %s24
        %v246 = vld [vmem:[%s218] sm:$0xff]
        %v247 = vld [vmem:[%s218 + $0x8] sm:$0xff]
        %v248 = vld [vmem:[%s218 + $0x10] sm:$0xff]
        %v249 = vld [vmem:[%s218 + $0x18] sm:$0xff]
        %v250 = vld [vmem:[%s218 + $0x20] sm:$0xff]
        %v251 = vld [vmem:[%s218 + $0x28] sm:$0xff]
        %v252 = vld [vmem:[%s218 + $0x30] sm:$0xff]
        %v253 = vld [vmem:[%s218 + $0x38] sm:$0xff]
        %v254 = vld [vmem:[%s1] sm:$0xff]
        %v255 = vld [vmem:[%s1 + $0x8] sm:$0xff]
        %v256 = vld [vmem:[%s1 + $0x10] sm:$0xff]
        %v257 = vld [vmem:[%s1 + $0x18] sm:$0xff]
        %v258 = vld [vmem:[%s2] sm:$0x1]
        %v260 = vlaneseq
        %v261 = vshrl.u32 %v260, 7
        %v262 = vsub.s32 0, %v261
        %v263 = vrot.slane %v258, %v262
        %vm265 = vcmask 261120
        %v267 = vsel %vm265, %v246, 0
        %v270 = vsel %vm265, %v247, 0
        %v273 = vsel %vm265, %v248, 0
        %v276 = vsel %vm265, %v249, 0
        %v279 = vsel %vm265, %v250, 0
        %v282 = vsel %vm265, %v251, 0
        %v285 = vsel %vm265, %v252, 0
        %v288 = vsel %vm265, %v253, 0
        %290 = vmatprep.subr.mxu0 0.0
        %291 = vmatpush1.msra.mxu0 0.0
        %292 = vmatprep.subr.mxu0 0.0
        %293 = vmatpush1.msra.mxu0 0.0
        %294 = vmatprep.subr.mxu0 0.0
        %295 = vmatpush1.msra.mxu0 0.0
        %296 = vmatprep.subr.mxu0 0.0
        %297 = vmatpush1.msra.mxu0 0.0
        %298 = vmatprep.subr.mxu0 0.0
        %299 = vmatpush1.msra.mxu0 0.0
        %300 = vmatprep.subr.mxu0 0.0
        %301 = vmatpush1.msra.mxu0 0.0
        %302 = vmatprep.subr.mxu0 0.0
        %303 = vmatpush1.msra.mxu0 0.0
        %304 = vmatprep.subr.mxu0 0.0
        %305 = vmatpush1.msra.mxu0 0.0
        %306 = vmatprep.subr.mxu0 0.0
        %307 = vmatpush1.msra.mxu0 0.0
        %308 = vmatprep.subr.mxu0 0.0
        %309 = vmatpush1.msra.mxu0 0.0
        %310 = vmatprep.subr.mxu0 0.0
        %311 = vmatpush1.msra.mxu0 0.0
        %312 = vmatprep.subr.mxu0 0.0
        %313 = vmatpush1.msra.mxu0 0.0
        %314 = vmatprep.subr.mxu0 0.0
        %315 = vmatpush1.msra.mxu0 %v257
        %316 = vmatprep.subr.mxu0 0.0
        %317 = vmatpush1.msra.mxu0 %v256
        %318 = vmatprep.subr.mxu0 0.0
        %319 = vmatpush1.msra.mxu0 %v255
        %320 = vmatprep.subr.mxu0 0.0
        %321 = vmatpush1.msra.mxu0 %v254
        %322 = vmatprep.subr.mxu0 0.0
        %323 = vmatpush2.msra.mxu0 0.0
        %324 = vmatprep.subr.mxu0 0.0
        %325 = vmatpush2.msra.mxu0 0.0
        %326 = vmatprep.subr.mxu0 0.0
        %327 = vmatpush2.msra.mxu0 0.0
        %328 = vmatprep.subr.mxu0 0.0
        %329 = vmatpush2.msra.mxu0 0.0
        %330 = vmatprep.subr.mxu0 0.0
        %331 = vmatpush2.msra.mxu0 0.0
        %332 = vmatprep.subr.mxu0 0.0
        %333 = vmatpush2.msra.mxu0 0.0
        %334 = vmatprep.subr.mxu0 0.0
        %335 = vmatpush2.msra.mxu0 0.0
        %336 = vmatprep.subr.mxu0 0.0
        %337 = vmatpush2.msra.mxu0 0.0
        %338 = vmatprep.subr.mxu0 0.0
        %339 = vmatpush2.msra.mxu0 0.0
        %340 = vmatprep.subr.mxu0 0.0
        %341 = vmatpush2.msra.mxu0 0.0
        %342 = vmatprep.subr.mxu0 0.0
        %343 = vmatpush2.msra.mxu0 0.0
        %344 = vmatprep.subr.mxu0 0.0
        %345 = vmatpush2.msra.mxu0 0.0
        %346 = vmatprep.subr.mxu0 0.0
        %347 = vmatpush2.msra.mxu0 0.0
        %348 = vmatprep.subr.mxu0 0.0
        %349 = vmatpush2.msra.mxu0 0.0
        %350 = vmatprep.subr.mxu0 0.0
        %351 = vmatpush2.msra.mxu0 0.0
        %352 = vmatprep.subr.mxu0 0.0
        %353 = vmatpush2.msra.mxu0 0.0
        %354 = vmatprep.mubr.f32.mxu0 0.0
        %355 = vmatmul.mubr.f32.gmra.mxu0 %v267
        %v356 = vpop.f32.mrf.mxu0
        %v357 = vadd.f32 %v263, %v356
        %v358 = vpop.f32.mrf.mxu0
        %359 = vmatprep.mubr.f32.mxu0 0.0
        %360 = vmatmul.mubr.f32.gmra.mxu0 %v270
        %v361 = vpop.f32.mrf.mxu0
        %v362 = vadd.f32 %v263, %v361
        %v363 = vpop.f32.mrf.mxu0
        %364 = vmatprep.mubr.f32.mxu0 0.0
        %365 = vmatmul.mubr.f32.gmra.mxu0 %v273
        %v366 = vpop.f32.mrf.mxu0
        %v367 = vadd.f32 %v263, %v366
        %v368 = vpop.f32.mrf.mxu0
        %369 = vmatprep.mubr.f32.mxu0 0.0
        %370 = vmatmul.mubr.f32.gmra.mxu0 %v276
        %v371 = vpop.f32.mrf.mxu0
        %v372 = vadd.f32 %v263, %v371
        %v373 = vpop.f32.mrf.mxu0
        %374 = vmatprep.mubr.f32.mxu0 0.0
        %375 = vmatmul.mubr.f32.gmra.mxu0 %v279
        %v376 = vpop.f32.mrf.mxu0
        %v377 = vadd.f32 %v263, %v376
        %v378 = vpop.f32.mrf.mxu0
        %379 = vmatprep.mubr.f32.mxu0 0.0
        %380 = vmatmul.mubr.f32.gmra.mxu0 %v282
        %v381 = vpop.f32.mrf.mxu0
        %v382 = vadd.f32 %v263, %v381
        %v383 = vpop.f32.mrf.mxu0
        %384 = vmatprep.mubr.f32.mxu0 0.0
        %385 = vmatmul.mubr.f32.gmra.mxu0 %v285
        %v386 = vpop.f32.mrf.mxu0
        %v387 = vadd.f32 %v263, %v386
        %v388 = vpop.f32.mrf.mxu0
        %389 = vmatprep.mubr.f32.mxu0 0.0
        %390 = vmatmul.mubr.f32.gmra.mxu0 %v288
        %v391 = vpop.f32.mrf.mxu0
        %v392 = vadd.f32 %v263, %v391
        %v393 = vpop.f32.mrf.mxu0
        %394 = vdwg.mxu0
        %v395 = vtanh.pop %v357
        %v396 = vtanh.pop %v362
        %v397 = vtanh.pop %v367
        %v398 = vtanh.pop %v372
        %v399 = vtanh.pop %v377
        %v400 = vtanh.pop %v382
        %v401 = vtanh.pop %v387
        %v402 = vtanh.pop %v392
        %v403 = vld [vmem:[%s3] sm:$0x1]
        %v405 = vlaneseq
        %v406 = vshrl.u32 %v405, 7
        %v407 = vsub.s32 0, %v406
        %v408 = vrot.slane %v403, %v407
        %v410 = vmul.f32 %v395, %v408
        %v411 = vmul.f32 %v396, %v408
        %v412 = vmul.f32 %v397, %v408
        %v413 = vmul.f32 %v398, %v408
        %v414 = vmul.f32 %v399, %v408
        %v415 = vmul.f32 %v400, %v408
        %v416 = vmul.f32 %v401, %v408
        %v417 = vmul.f32 %v402, %v408
        %vm418 = vcmask 130048
        %v419 = vsel %vm418, %v410, 0.0
        %420 = vadd.xlane.f32.xlu0 %v419
        %v421 = vpop.xlane.xlu0 %420
        %v422 = vsel %vm418, %v411, 0.0
        %423 = vadd.xlane.f32.xlu0 %v422
        %v424 = vpop.xlane.xlu0 %423
        %v425 = vsel %vm418, %v412, 0.0
        %426 = vadd.xlane.f32.xlu0 %v425
        %v427 = vpop.xlane.xlu0 %426
        %v428 = vsel %vm418, %v413, 0.0
        %429 = vadd.xlane.f32.xlu0 %v428
        %v430 = vpop.xlane.xlu0 %429
        %v431 = vsel %vm418, %v414, 0.0
        %432 = vadd.xlane.f32.xlu0 %v431
        %v433 = vpop.xlane.xlu0 %432
        %v434 = vsel %vm418, %v415, 0.0
        %435 = vadd.xlane.f32.xlu0 %v434
        %v436 = vpop.xlane.xlu0 %435
        %v437 = vsel %vm418, %v416, 0.0
        %438 = vadd.xlane.f32.xlu0 %v437
        %v439 = vpop.xlane.xlu0 %438
        %v440 = vsel %vm418, %v417, 0.0
        %441 = vadd.xlane.f32.xlu0 %v440
        %v442 = vpop.xlane.xlu0 %441
        %v443 = vld [vmem:[#allocation2] sm:$0x1]
        %v445 = vlaneseq
        %v446 = vshrl.u32 %v445, 7
        %v447 = vsub.s32 0, %v446
        %v448 = vrot.slane %v443, %v447
        %449 = vset.pattern.permute.xlu0 0
        %450 = vperm.xlu0 %449, %v448
        %v451 = vpop.permute.xlu0 %450
        %v453 = vadd.f32 %v421, %v451
        %v454 = vadd.f32 %v424, %v451
        %v455 = vadd.f32 %v427, %v451
        %v456 = vadd.f32 %v430, %v451
        %v457 = vadd.f32 %v433, %v451
        %v458 = vadd.f32 %v436, %v451
        %v459 = vadd.f32 %v439, %v451
        %v460 = vadd.f32 %v442, %v451
        %v469 = vlaneseq
        %v470 = vand.u32 %v469, 127
        %v471 = vlaneseq
        %v472 = vshrl.u32 %v471, 7
        %v473 = vsub.s32 %v470, %v472
        %v474 = vrot.slane %v453, %v473
        %v475 = vlaneseq
        %v476 = vshrl.u32 %v475, 7
        %v477 = vsub.s32 %v470, %v476
        %v478 = vrot.slane %v454, %v477
        %v479 = vlaneseq
        %v480 = vshrl.u32 %v479, 7
        %v481 = vsub.s32 %v470, %v480
        %v482 = vrot.slane %v455, %v481
        %v483 = vlaneseq
        %v484 = vshrl.u32 %v483, 7
        %v485 = vsub.s32 %v470, %v484
        %v486 = vrot.slane %v456, %v485
        %v487 = vlaneseq
        %v488 = vshrl.u32 %v487, 7
        %v489 = vsub.s32 %v470, %v488
        %v490 = vrot.slane %v457, %v489
        %v491 = vlaneseq
        %v492 = vshrl.u32 %v491, 7
        %v493 = vsub.s32 %v470, %v492
        %v494 = vrot.slane %v458, %v493
        %v495 = vlaneseq
        %v496 = vshrl.u32 %v495, 7
        %v497 = vsub.s32 %v470, %v496
        %v498 = vrot.slane %v459, %v497
        %v499 = vlaneseq
        %v500 = vshrl.u32 %v499, 7
        %v501 = vsub.s32 %v470, %v500
        %v502 = vrot.slane %v460, %v501
        %vm503 = vcmask 1041409
        %v504 = vsel %vm503, %v478, %v474
        %vm505 = vcmask 1042434
        %v506 = vsel %vm505, %v482, %v504
        %vm507 = vcmask 1043459
        %v508 = vsel %vm507, %v486, %v506
        %vm509 = vcmask 1044484
        %v510 = vsel %vm509, %v490, %v508
        %vm511 = vcmask 1045509
        %v512 = vsel %vm511, %v494, %v510
        %vm513 = vcmask 1046534
        %v514 = vsel %vm513, %v498, %v512
        %vm515 = vcmask 1047559
        %v516 = vsel %vm515, %v502, %v514
        %vm518 = vcmask 64512
        %v519 = vsel %vm518, %v516, -inf
        %520 = vmax.xlane.f32.xlu0 %v519
        %v521 = vpop.xlane.xlu0 %520
        %v523 = vlaneseq
        %v524 = vshrl.u32 %v523, 7
        %v525 = vsub.s32 0, %v524
        %v526 = vrot.slane %v521, %v525
        %v527 = vlaneseq
        %v528 = vshrl.u32 %v527, 7
        %v529 = vsub.s32 1, %v528
        %v530 = vrot.slane %v521, %v529
        %v531 = vlaneseq
        %v532 = vshrl.u32 %v531, 7
        %v533 = vsub.s32 2, %v532
        %v534 = vrot.slane %v521, %v533
        %v535 = vlaneseq
        %v536 = vshrl.u32 %v535, 7
        %v537 = vsub.s32 3, %v536
        %v538 = vrot.slane %v521, %v537
        %v539 = vlaneseq
        %v540 = vshrl.u32 %v539, 7
        %v541 = vsub.s32 4, %v540
        %v542 = vrot.slane %v521, %v541
        %v543 = vlaneseq
        %v544 = vshrl.u32 %v543, 7
        %v545 = vsub.s32 5, %v544
        %v546 = vrot.slane %v521, %v545
        %v547 = vlaneseq
        %v548 = vshrl.u32 %v547, 7
        %v549 = vsub.s32 6, %v548
        %v550 = vrot.slane %v521, %v549
        %v551 = vlaneseq
        %v552 = vshrl.u32 %v551, 7
        %v553 = vsub.s32 7, %v552
        %v554 = vrot.slane %v521, %v553
        %v563 = vsub.f32 %v453, %v526
        %v564 = vsub.f32 %v454, %v530
        %v565 = vsub.f32 %v455, %v534
        %v566 = vsub.f32 %v456, %v538
        %v567 = vsub.f32 %v457, %v542
        %v568 = vsub.f32 %v458, %v546
        %v569 = vsub.f32 %v459, %v550
        %v570 = vsub.f32 %v460, %v554
        %v571 = vmul.f32 %v563, 1.442695
        %v572 = vpow.pop %v571
        %v573 = vmul.f32 %v564, 1.442695
        %v574 = vpow.pop %v573
        %v575 = vmul.f32 %v565, 1.442695
        %v576 = vpow.pop %v575
        %v577 = vmul.f32 %v566, 1.442695
        %v578 = vpow.pop %v577
        %v579 = vmul.f32 %v567, 1.442695
        %v580 = vpow.pop %v579
        %v581 = vmul.f32 %v568, 1.442695
        %v582 = vpow.pop %v581
        %v583 = vmul.f32 %v569, 1.442695
        %v584 = vpow.pop %v583
        %v585 = vmul.f32 %v570, 1.442695
        %v586 = vpow.pop %v585
        %595 = vset.pattern.permute.xlu0 0
        %596 = vperm.xlu0 %595, %v572
        %v597 = vpop.permute.xlu0 %596
        %598 = vset.pattern.permute.xlu0 0
        %599 = vperm.xlu0 %598, %v574
        %v600 = vpop.permute.xlu0 %599
        %601 = vset.pattern.permute.xlu0 0
        %602 = vperm.xlu0 %601, %v576
        %v603 = vpop.permute.xlu0 %602
        %604 = vset.pattern.permute.xlu0 0
        %605 = vperm.xlu0 %604, %v578
        %v606 = vpop.permute.xlu0 %605
        %607 = vset.pattern.permute.xlu0 0
        %608 = vperm.xlu0 %607, %v580
        %v609 = vpop.permute.xlu0 %608
        %610 = vset.pattern.permute.xlu0 0
        %611 = vperm.xlu0 %610, %v582
        %v612 = vpop.permute.xlu0 %611
        %613 = vset.pattern.permute.xlu0 0
        %614 = vperm.xlu0 %613, %v584
        %v615 = vpop.permute.xlu0 %614
        %616 = vset.pattern.permute.xlu0 0
        %617 = vperm.xlu0 %616, %v586
        %v618 = vpop.permute.xlu0 %617
        %v619 = vlaneseq
        %v620 = vshrl.u32 %v619, 7
        %v621 = vsub.s32 %v470, %v620
        %v622 = vrot.slane %v597, %v621
        %v623 = vlaneseq
        %v624 = vshrl.u32 %v623, 7
        %v625 = vsub.s32 %v470, %v624
        %v626 = vrot.slane %v600, %v625
        %v627 = vlaneseq
        %v628 = vshrl.u32 %v627, 7
        %v629 = vsub.s32 %v470, %v628
        %v630 = vrot.slane %v603, %v629
        %v631 = vlaneseq
        %v632 = vshrl.u32 %v631, 7
        %v633 = vsub.s32 %v470, %v632
        %v634 = vrot.slane %v606, %v633
        %v635 = vlaneseq
        %v636 = vshrl.u32 %v635, 7
        %v637 = vsub.s32 %v470, %v636
        %v638 = vrot.slane %v609, %v637
        %v639 = vlaneseq
        %v640 = vshrl.u32 %v639, 7
        %v641 = vsub.s32 %v470, %v640
        %v642 = vrot.slane %v612, %v641
        %v643 = vlaneseq
        %v644 = vshrl.u32 %v643, 7
        %v645 = vsub.s32 %v470, %v644
        %v646 = vrot.slane %v615, %v645
        %v647 = vlaneseq
        %v648 = vshrl.u32 %v647, 7
        %v649 = vsub.s32 %v470, %v648
        %v650 = vrot.slane %v618, %v649
        %v651 = vsel %vm503, %v626, %v622
        %v652 = vsel %vm505, %v630, %v651
        %v653 = vsel %vm507, %v634, %v652
        %v654 = vsel %vm509, %v638, %v653
        %v655 = vsel %vm511, %v642, %v654
        %v656 = vsel %vm513, %v646, %v655
        %v657 = vsel %vm515, %v650, %v656
        %v659 = vsel %vm518, %v657, 0.0
        %660 = vadd.xlane.f32.xlu0 %v659
        %v661 = vpop.xlane.xlu0 %660
        %v662 = vrcp.pop %v661
        %v664 = vlaneseq
        %v665 = vshrl.u32 %v664, 7
        %v666 = vsub.s32 0, %v665
        %v667 = vrot.slane %v662, %v666
        %v668 = vlaneseq
        %v669 = vshrl.u32 %v668, 7
        %v670 = vsub.s32 1, %v669
        %v671 = vrot.slane %v662, %v670
        %v672 = vlaneseq
        %v673 = vshrl.u32 %v672, 7
        %v674 = vsub.s32 2, %v673
        %v675 = vrot.slane %v662, %v674
        %v676 = vlaneseq
        %v677 = vshrl.u32 %v676, 7
        %v678 = vsub.s32 3, %v677
        %v679 = vrot.slane %v662, %v678
        %v680 = vlaneseq
        %v681 = vshrl.u32 %v680, 7
        %v682 = vsub.s32 4, %v681
        %v683 = vrot.slane %v662, %v682
        %v684 = vlaneseq
        %v685 = vshrl.u32 %v684, 7
        %v686 = vsub.s32 5, %v685
        %v687 = vrot.slane %v662, %v686
        %v688 = vlaneseq
        %v689 = vshrl.u32 %v688, 7
        %v690 = vsub.s32 6, %v689
        %v691 = vrot.slane %v662, %v690
        %v692 = vlaneseq
        %v693 = vshrl.u32 %v692, 7
        %v694 = vsub.s32 7, %v693
        %v695 = vrot.slane %v662, %v694
        %v704 = vmul.f32 %v572, %v667
        %v705 = vmul.f32 %v574, %v671
        %v706 = vmul.f32 %v576, %v675
        %v707 = vmul.f32 %v578, %v679
        %v708 = vmul.f32 %v580, %v683
        %v709 = vmul.f32 %v582, %v687
        %v710 = vmul.f32 %v584, %v691
        %v711 = vmul.f32 %v586, %v695
        %713 = vset.pattern.permute.xlu0 0
        %714 = vperm.xlu0 %713, %v704
        %v715 = vpop.permute.xlu0 %714
        %v716 = vlaneseq
        %v717 = vshrl.u32 %v716, 7
        %v718 = vsub.s32 %v470, %v717
        %v719 = vrot.slane %v715, %v718
        %v720 = vsel %vm518, %v719, 0
        %722 = vmatprep.subr.mxu0 0.0
        %723 = vmatpush1.msra.mxu0 0.0
        %724 = vmatprep.subr.mxu0 0.0
        %725 = vmatpush1.msra.mxu0 0.0
        %726 = vmatprep.subr.mxu0 0.0
        %727 = vmatpush1.msra.mxu0 0.0
        %728 = vmatprep.subr.mxu0 0.0
        %729 = vmatpush1.msra.mxu0 0.0
        %730 = vmatprep.subr.mxu0 0.0
        %731 = vmatpush1.msra.mxu0 0.0
        %732 = vmatprep.subr.mxu0 0.0
        %733 = vmatpush1.msra.mxu0 0.0
        %734 = vmatprep.subr.mxu0 0.0
        %735 = vmatpush1.msra.mxu0 0.0
        %736 = vmatprep.subr.mxu0 0.0
        %737 = vmatpush1.msra.mxu0 0.0
        %738 = vmatprep.subr.mxu0 0.0
        %739 = vmatpush1.msra.mxu0 0.0
        %740 = vmatprep.subr.mxu0 0.0
        %741 = vmatpush1.msra.mxu0 0.0
        %742 = vmatprep.subr.mxu0 0.0
        %743 = vmatpush1.msra.mxu0 0.0
        %744 = vmatprep.subr.mxu0 0.0
        %745 = vmatpush1.msra.mxu0 0.0
        %746 = vmatprep.subr.mxu0 0.0
        %747 = vmatpush1.msra.mxu0 0.0
        %748 = vmatprep.subr.mxu0 0.0
        %749 = vmatpush1.msra.mxu0 0.0
        %750 = vmatprep.subr.mxu0 0.0
        %751 = vmatpush1.msra.mxu0 0.0
        %752 = vmatprep.subr.mxu0 0.0
        %753 = vmatpush1.msra.mxu0 %v246
        %754 = vmatprep.subr.mxu0 0.0
        %755 = vmatpush2.msra.mxu0 0.0
        %756 = vmatprep.subr.mxu0 0.0
        %757 = vmatpush2.msra.mxu0 0.0
        %758 = vmatprep.subr.mxu0 0.0
        %759 = vmatpush2.msra.mxu0 0.0
        %760 = vmatprep.subr.mxu0 0.0
        %761 = vmatpush2.msra.mxu0 0.0
        %762 = vmatprep.subr.mxu0 0.0
        %763 = vmatpush2.msra.mxu0 0.0
        %764 = vmatprep.subr.mxu0 0.0
        %765 = vmatpush2.msra.mxu0 0.0
        %766 = vmatprep.subr.mxu0 0.0
        %767 = vmatpush2.msra.mxu0 0.0
        %768 = vmatprep.subr.mxu0 0.0
        %769 = vmatpush2.msra.mxu0 0.0
        %770 = vmatprep.subr.mxu0 0.0
        %771 = vmatpush2.msra.mxu0 0.0
        %772 = vmatprep.subr.mxu0 0.0
        %773 = vmatpush2.msra.mxu0 0.0
        %774 = vmatprep.subr.mxu0 0.0
        %775 = vmatpush2.msra.mxu0 0.0
        %776 = vmatprep.subr.mxu0 0.0
        %777 = vmatpush2.msra.mxu0 0.0
        %778 = vmatprep.subr.mxu0 0.0
        %779 = vmatpush2.msra.mxu0 0.0
        %780 = vmatprep.subr.mxu0 0.0
        %781 = vmatpush2.msra.mxu0 0.0
        %782 = vmatprep.subr.mxu0 0.0
        %783 = vmatpush2.msra.mxu0 0.0
        %784 = vmatprep.subr.mxu0 0.0
        %785 = vmatpush2.msra.mxu0 0.0
        %786 = vmatprep.mubr.f32.mxu0 0.0
        %787 = vmatmul.mubr.f32.gmra.mxu0 %v720
        %v788 = vpop.f32.mrf.mxu0
        %v789 = vadd.f32 0.0, %v788
        %v790 = vpop.f32.mrf.mxu0
        %791 = vdwg.mxu0
        %793 = vset.pattern.permute.xlu0 0
        %794 = vperm.xlu0 %793, %v705
        %v795 = vpop.permute.xlu0 %794
        %v796 = vlaneseq
        %v797 = vshrl.u32 %v796, 7
        %v798 = vsub.s32 %v470, %v797
        %v799 = vrot.slane %v795, %v798
        %v800 = vsel %vm518, %v799, 0
        %802 = vmatprep.subr.mxu0 0.0
        %803 = vmatpush1.msra.mxu0 0.0
        %804 = vmatprep.subr.mxu0 0.0
        %805 = vmatpush1.msra.mxu0 0.0
        %806 = vmatprep.subr.mxu0 0.0
        %807 = vmatpush1.msra.mxu0 0.0
        %808 = vmatprep.subr.mxu0 0.0
        %809 = vmatpush1.msra.mxu0 0.0
        %810 = vmatprep.subr.mxu0 0.0
        %811 = vmatpush1.msra.mxu0 0.0
        %812 = vmatprep.subr.mxu0 0.0
        %813 = vmatpush1.msra.mxu0 0.0
        %814 = vmatprep.subr.mxu0 0.0
        %815 = vmatpush1.msra.mxu0 0.0
        %816 = vmatprep.subr.mxu0 0.0
        %817 = vmatpush1.msra.mxu0 0.0
        %818 = vmatprep.subr.mxu0 0.0
        %819 = vmatpush1.msra.mxu0 0.0
        %820 = vmatprep.subr.mxu0 0.0
        %821 = vmatpush1.msra.mxu0 0.0
        %822 = vmatprep.subr.mxu0 0.0
        %823 = vmatpush1.msra.mxu0 0.0
        %824 = vmatprep.subr.mxu0 0.0
        %825 = vmatpush1.msra.mxu0 0.0
        %826 = vmatprep.subr.mxu0 0.0
        %827 = vmatpush1.msra.mxu0 0.0
        %828 = vmatprep.subr.mxu0 0.0
        %829 = vmatpush1.msra.mxu0 0.0
        %830 = vmatprep.subr.mxu0 0.0
        %831 = vmatpush1.msra.mxu0 0.0
        %832 = vmatprep.subr.mxu0 0.0
        %833 = vmatpush1.msra.mxu0 %v247
        %834 = vmatprep.subr.mxu0 0.0
        %835 = vmatpush2.msra.mxu0 0.0
        %836 = vmatprep.subr.mxu0 0.0
        %837 = vmatpush2.msra.mxu0 0.0
        %838 = vmatprep.subr.mxu0 0.0
        %839 = vmatpush2.msra.mxu0 0.0
        %840 = vmatprep.subr.mxu0 0.0
        %841 = vmatpush2.msra.mxu0 0.0
        %842 = vmatprep.subr.mxu0 0.0
        %843 = vmatpush2.msra.mxu0 0.0
        %844 = vmatprep.subr.mxu0 0.0
        %845 = vmatpush2.msra.mxu0 0.0
        %846 = vmatprep.subr.mxu0 0.0
        %847 = vmatpush2.msra.mxu0 0.0
        %848 = vmatprep.subr.mxu0 0.0
        %849 = vmatpush2.msra.mxu0 0.0
        %850 = vmatprep.subr.mxu0 0.0
        %851 = vmatpush2.msra.mxu0 0.0
        %852 = vmatprep.subr.mxu0 0.0
        %853 = vmatpush2.msra.mxu0 0.0
        %854 = vmatprep.subr.mxu0 0.0
        %855 = vmatpush2.msra.mxu0 0.0
        %856 = vmatprep.subr.mxu0 0.0
        %857 = vmatpush2.msra.mxu0 0.0
        %858 = vmatprep.subr.mxu0 0.0
        %859 = vmatpush2.msra.mxu0 0.0
        %860 = vmatprep.subr.mxu0 0.0
        %861 = vmatpush2.msra.mxu0 0.0
        %862 = vmatprep.subr.mxu0 0.0
        %863 = vmatpush2.msra.mxu0 0.0
        %864 = vmatprep.subr.mxu0 0.0
        %865 = vmatpush2.msra.mxu0 0.0
        %866 = vmatprep.mubr.f32.mxu0 0.0
        %867 = vmatmul.mubr.f32.gmra.mxu0 %v800
        %v868 = vpop.f32.mrf.mxu0
        %v869 = vadd.f32 0.0, %v868
        %v870 = vpop.f32.mrf.mxu0
        %871 = vdwg.mxu0
        %873 = vset.pattern.permute.xlu0 0
        %874 = vperm.xlu0 %873, %v706
        %v875 = vpop.permute.xlu0 %874
        %v876 = vlaneseq
        %v877 = vshrl.u32 %v876, 7
        %v878 = vsub.s32 %v470, %v877
        %v879 = vrot.slane %v875, %v878
        %v880 = vsel %vm518, %v879, 0
        %882 = vmatprep.subr.mxu0 0.0
        %883 = vmatpush1.msra.mxu0 0.0
        %884 = vmatprep.subr.mxu0 0.0
        %885 = vmatpush1.msra.mxu0 0.0
        %886 = vmatprep.subr.mxu0 0.0
        %887 = vmatpush1.msra.mxu0 0.0
        %888 = vmatprep.subr.mxu0 0.0
        %889 = vmatpush1.msra.mxu0 0.0
        %890 = vmatprep.subr.mxu0 0.0
        %891 = vmatpush1.msra.mxu0 0.0
        %892 = vmatprep.subr.mxu0 0.0
        %893 = vmatpush1.msra.mxu0 0.0
        %894 = vmatprep.subr.mxu0 0.0
        %895 = vmatpush1.msra.mxu0 0.0
        %896 = vmatprep.subr.mxu0 0.0
        %897 = vmatpush1.msra.mxu0 0.0
        %898 = vmatprep.subr.mxu0 0.0
        %899 = vmatpush1.msra.mxu0 0.0
        %900 = vmatprep.subr.mxu0 0.0
        %901 = vmatpush1.msra.mxu0 0.0
        %902 = vmatprep.subr.mxu0 0.0
        %903 = vmatpush1.msra.mxu0 0.0
        %904 = vmatprep.subr.mxu0 0.0
        %905 = vmatpush1.msra.mxu0 0.0
        %906 = vmatprep.subr.mxu0 0.0
        %907 = vmatpush1.msra.mxu0 0.0
        %908 = vmatprep.subr.mxu0 0.0
        %909 = vmatpush1.msra.mxu0 0.0
        %910 = vmatprep.subr.mxu0 0.0
        %911 = vmatpush1.msra.mxu0 0.0
        %912 = vmatprep.subr.mxu0 0.0
        %913 = vmatpush1.msra.mxu0 %v248
        %914 = vmatprep.subr.mxu0 0.0
        %915 = vmatpush2.msra.mxu0 0.0
        %916 = vmatprep.subr.mxu0 0.0
        %917 = vmatpush2.msra.mxu0 0.0
        %918 = vmatprep.subr.mxu0 0.0
        %919 = vmatpush2.msra.mxu0 0.0
        %920 = vmatprep.subr.mxu0 0.0
        %921 = vmatpush2.msra.mxu0 0.0
        %922 = vmatprep.subr.mxu0 0.0
        %923 = vmatpush2.msra.mxu0 0.0
        %924 = vmatprep.subr.mxu0 0.0
        %925 = vmatpush2.msra.mxu0 0.0
        %926 = vmatprep.subr.mxu0 0.0
        %927 = vmatpush2.msra.mxu0 0.0
        %928 = vmatprep.subr.mxu0 0.0
        %929 = vmatpush2.msra.mxu0 0.0
        %930 = vmatprep.subr.mxu0 0.0
        %931 = vmatpush2.msra.mxu0 0.0
        %932 = vmatprep.subr.mxu0 0.0
        %933 = vmatpush2.msra.mxu0 0.0
        %934 = vmatprep.subr.mxu0 0.0
        %935 = vmatpush2.msra.mxu0 0.0
        %936 = vmatprep.subr.mxu0 0.0
        %937 = vmatpush2.msra.mxu0 0.0
        %938 = vmatprep.subr.mxu0 0.0
        %939 = vmatpush2.msra.mxu0 0.0
        %940 = vmatprep.subr.mxu0 0.0
        %941 = vmatpush2.msra.mxu0 0.0
        %942 = vmatprep.subr.mxu0 0.0
        %943 = vmatpush2.msra.mxu0 0.0
        %944 = vmatprep.subr.mxu0 0.0
        %945 = vmatpush2.msra.mxu0 0.0
        %946 = vmatprep.mubr.f32.mxu0 0.0
        %947 = vmatmul.mubr.f32.gmra.mxu0 %v880
        %v948 = vpop.f32.mrf.mxu0
        %v949 = vadd.f32 0.0, %v948
        %v950 = vpop.f32.mrf.mxu0
        %951 = vdwg.mxu0
        %953 = vset.pattern.permute.xlu0 0
        %954 = vperm.xlu0 %953, %v707
        %v955 = vpop.permute.xlu0 %954
        %v956 = vlaneseq
        %v957 = vshrl.u32 %v956, 7
        %v958 = vsub.s32 %v470, %v957
        %v959 = vrot.slane %v955, %v958
        %v960 = vsel %vm518, %v959, 0
        %962 = vmatprep.subr.mxu0 0.0
        %963 = vmatpush1.msra.mxu0 0.0
        %964 = vmatprep.subr.mxu0 0.0
        %965 = vmatpush1.msra.mxu0 0.0
        %966 = vmatprep.subr.mxu0 0.0
        %967 = vmatpush1.msra.mxu0 0.0
        %968 = vmatprep.subr.mxu0 0.0
        %969 = vmatpush1.msra.mxu0 0.0
        %970 = vmatprep.subr.mxu0 0.0
        %971 = vmatpush1.msra.mxu0 0.0
        %972 = vmatprep.subr.mxu0 0.0
        %973 = vmatpush1.msra.mxu0 0.0
        %974 = vmatprep.subr.mxu0 0.0
        %975 = vmatpush1.msra.mxu0 0.0
        %976 = vmatprep.subr.mxu0 0.0
        %977 = vmatpush1.msra.mxu0 0.0
        %978 = vmatprep.subr.mxu0 0.0
        %979 = vmatpush1.msra.mxu0 0.0
        %980 = vmatprep.subr.mxu0 0.0
        %981 = vmatpush1.msra.mxu0 0.0
        %982 = vmatprep.subr.mxu0 0.0
        %983 = vmatpush1.msra.mxu0 0.0
        %984 = vmatprep.subr.mxu0 0.0
        %985 = vmatpush1.msra.mxu0 0.0
        %986 = vmatprep.subr.mxu0 0.0
        %987 = vmatpush1.msra.mxu0 0.0
        %988 = vmatprep.subr.mxu0 0.0
        %989 = vmatpush1.msra.mxu0 0.0
        %990 = vmatprep.subr.mxu0 0.0
        %991 = vmatpush1.msra.mxu0 0.0
        %992 = vmatprep.subr.mxu0 0.0
        %993 = vmatpush1.msra.mxu0 %v249
        %994 = vmatprep.subr.mxu0 0.0
        %995 = vmatpush2.msra.mxu0 0.0
        %996 = vmatprep.subr.mxu0 0.0
        %997 = vmatpush2.msra.mxu0 0.0
        %998 = vmatprep.subr.mxu0 0.0
        %999 = vmatpush2.msra.mxu0 0.0
        %1000 = vmatprep.subr.mxu0 0.0
        %1001 = vmatpush2.msra.mxu0 0.0
        %1002 = vmatprep.subr.mxu0 0.0
        %1003 = vmatpush2.msra.mxu0 0.0
        %1004 = vmatprep.subr.mxu0 0.0
        %1005 = vmatpush2.msra.mxu0 0.0
        %1006 = vmatprep.subr.mxu0 0.0
        %1007 = vmatpush2.msra.mxu0 0.0
        %1008 = vmatprep.subr.mxu0 0.0
        %1009 = vmatpush2.msra.mxu0 0.0
        %1010 = vmatprep.subr.mxu0 0.0
        %1011 = vmatpush2.msra.mxu0 0.0
        %1012 = vmatprep.subr.mxu0 0.0
        %1013 = vmatpush2.msra.mxu0 0.0
        %1014 = vmatprep.subr.mxu0 0.0
        %1015 = vmatpush2.msra.mxu0 0.0
        %1016 = vmatprep.subr.mxu0 0.0
        %1017 = vmatpush2.msra.mxu0 0.0
        %1018 = vmatprep.subr.mxu0 0.0
        %1019 = vmatpush2.msra.mxu0 0.0
        %1020 = vmatprep.subr.mxu0 0.0
        %1021 = vmatpush2.msra.mxu0 0.0
        %1022 = vmatprep.subr.mxu0 0.0
        %1023 = vmatpush2.msra.mxu0 0.0
        %1024 = vmatprep.subr.mxu0 0.0
        %1025 = vmatpush2.msra.mxu0 0.0
        %1026 = vmatprep.mubr.f32.mxu0 0.0
        %1027 = vmatmul.mubr.f32.gmra.mxu0 %v960
        %v1028 = vpop.f32.mrf.mxu0
        %v1029 = vadd.f32 0.0, %v1028
        %v1030 = vpop.f32.mrf.mxu0
        %1031 = vdwg.mxu0
        %1033 = vset.pattern.permute.xlu0 0
        %1034 = vperm.xlu0 %1033, %v708
        %v1035 = vpop.permute.xlu0 %1034
        %v1036 = vlaneseq
        %v1037 = vshrl.u32 %v1036, 7
        %v1038 = vsub.s32 %v470, %v1037
        %v1039 = vrot.slane %v1035, %v1038
        %v1040 = vsel %vm518, %v1039, 0
        %1042 = vmatprep.subr.mxu0 0.0
        %1043 = vmatpush1.msra.mxu0 0.0
        %1044 = vmatprep.subr.mxu0 0.0
        %1045 = vmatpush1.msra.mxu0 0.0
        %1046 = vmatprep.subr.mxu0 0.0
        %1047 = vmatpush1.msra.mxu0 0.0
        %1048 = vmatprep.subr.mxu0 0.0
        %1049 = vmatpush1.msra.mxu0 0.0
        %1050 = vmatprep.subr.mxu0 0.0
        %1051 = vmatpush1.msra.mxu0 0.0
        %1052 = vmatprep.subr.mxu0 0.0
        %1053 = vmatpush1.msra.mxu0 0.0
        %1054 = vmatprep.subr.mxu0 0.0
        %1055 = vmatpush1.msra.mxu0 0.0
        %1056 = vmatprep.subr.mxu0 0.0
        %1057 = vmatpush1.msra.mxu0 0.0
        %1058 = vmatprep.subr.mxu0 0.0
        %1059 = vmatpush1.msra.mxu0 0.0
        %1060 = vmatprep.subr.mxu0 0.0
        %1061 = vmatpush1.msra.mxu0 0.0
        %1062 = vmatprep.subr.mxu0 0.0
        %1063 = vmatpush1.msra.mxu0 0.0
        %1064 = vmatprep.subr.mxu0 0.0
        %1065 = vmatpush1.msra.mxu0 0.0
        %1066 = vmatprep.subr.mxu0 0.0
        %1067 = vmatpush1.msra.mxu0 0.0
        %1068 = vmatprep.subr.mxu0 0.0
        %1069 = vmatpush1.msra.mxu0 0.0
        %1070 = vmatprep.subr.mxu0 0.0
        %1071 = vmatpush1.msra.mxu0 0.0
        %1072 = vmatprep.subr.mxu0 0.0
        %1073 = vmatpush1.msra.mxu0 %v250
        %1074 = vmatprep.subr.mxu0 0.0
        %1075 = vmatpush2.msra.mxu0 0.0
        %1076 = vmatprep.subr.mxu0 0.0
        %1077 = vmatpush2.msra.mxu0 0.0
        %1078 = vmatprep.subr.mxu0 0.0
        %1079 = vmatpush2.msra.mxu0 0.0
        %1080 = vmatprep.subr.mxu0 0.0
        %1081 = vmatpush2.msra.mxu0 0.0
        %1082 = vmatprep.subr.mxu0 0.0
        %1083 = vmatpush2.msra.mxu0 0.0
        %1084 = vmatprep.subr.mxu0 0.0
        %1085 = vmatpush2.msra.mxu0 0.0
        %1086 = vmatprep.subr.mxu0 0.0
        %1087 = vmatpush2.msra.mxu0 0.0
        %1088 = vmatprep.subr.mxu0 0.0
        %1089 = vmatpush2.msra.mxu0 0.0
        %1090 = vmatprep.subr.mxu0 0.0
        %1091 = vmatpush2.msra.mxu0 0.0
        %1092 = vmatprep.subr.mxu0 0.0
        %1093 = vmatpush2.msra.mxu0 0.0
        %1094 = vmatprep.subr.mxu0 0.0
        %1095 = vmatpush2.msra.mxu0 0.0
        %1096 = vmatprep.subr.mxu0 0.0
        %1097 = vmatpush2.msra.mxu0 0.0
        %1098 = vmatprep.subr.mxu0 0.0
        %1099 = vmatpush2.msra.mxu0 0.0
        %1100 = vmatprep.subr.mxu0 0.0
        %1101 = vmatpush2.msra.mxu0 0.0
        %1102 = vmatprep.subr.mxu0 0.0
        %1103 = vmatpush2.msra.mxu0 0.0
        %1104 = vmatprep.subr.mxu0 0.0
        %1105 = vmatpush2.msra.mxu0 0.0
        %1106 = vmatprep.mubr.f32.mxu0 0.0
        %1107 = vmatmul.mubr.f32.gmra.mxu0 %v1040
        %v1108 = vpop.f32.mrf.mxu0
        %v1109 = vadd.f32 0.0, %v1108
        %v1110 = vpop.f32.mrf.mxu0
        %1111 = vdwg.mxu0
        %1113 = vset.pattern.permute.xlu0 0
        %1114 = vperm.xlu0 %1113, %v709
        %v1115 = vpop.permute.xlu0 %1114
        %v1116 = vlaneseq
        %v1117 = vshrl.u32 %v1116, 7
        %v1118 = vsub.s32 %v470, %v1117
        %v1119 = vrot.slane %v1115, %v1118
        %v1120 = vsel %vm518, %v1119, 0
        %1122 = vmatprep.subr.mxu0 0.0
        %1123 = vmatpush1.msra.mxu0 0.0
        %1124 = vmatprep.subr.mxu0 0.0
        %1125 = vmatpush1.msra.mxu0 0.0
        %1126 = vmatprep.subr.mxu0 0.0
        %1127 = vmatpush1.msra.mxu0 0.0
        %1128 = vmatprep.subr.mxu0 0.0
        %1129 = vmatpush1.msra.mxu0 0.0
        %1130 = vmatprep.subr.mxu0 0.0
        %1131 = vmatpush1.msra.mxu0 0.0
        %1132 = vmatprep.subr.mxu0 0.0
        %1133 = vmatpush1.msra.mxu0 0.0
        %1134 = vmatprep.subr.mxu0 0.0
        %1135 = vmatpush1.msra.mxu0 0.0
        %1136 = vmatprep.subr.mxu0 0.0
        %1137 = vmatpush1.msra.mxu0 0.0
        %1138 = vmatprep.subr.mxu0 0.0
        %1139 = vmatpush1.msra.mxu0 0.0
        %1140 = vmatprep.subr.mxu0 0.0
        %1141 = vmatpush1.msra.mxu0 0.0
        %1142 = vmatprep.subr.mxu0 0.0
        %1143 = vmatpush1.msra.mxu0 0.0
        %1144 = vmatprep.subr.mxu0 0.0
        %1145 = vmatpush1.msra.mxu0 0.0
        %1146 = vmatprep.subr.mxu0 0.0
        %1147 = vmatpush1.msra.mxu0 0.0
        %1148 = vmatprep.subr.mxu0 0.0
        %1149 = vmatpush1.msra.mxu0 0.0
        %1150 = vmatprep.subr.mxu0 0.0
        %1151 = vmatpush1.msra.mxu0 0.0
        %1152 = vmatprep.subr.mxu0 0.0
        %1153 = vmatpush1.msra.mxu0 %v251
        %1154 = vmatprep.subr.mxu0 0.0
        %1155 = vmatpush2.msra.mxu0 0.0
        %1156 = vmatprep.subr.mxu0 0.0
        %1157 = vmatpush2.msra.mxu0 0.0
        %1158 = vmatprep.subr.mxu0 0.0
        %1159 = vmatpush2.msra.mxu0 0.0
        %1160 = vmatprep.subr.mxu0 0.0
        %1161 = vmatpush2.msra.mxu0 0.0
        %1162 = vmatprep.subr.mxu0 0.0
        %1163 = vmatpush2.msra.mxu0 0.0
        %1164 = vmatprep.subr.mxu0 0.0
        %1165 = vmatpush2.msra.mxu0 0.0
        %1166 = vmatprep.subr.mxu0 0.0
        %1167 = vmatpush2.msra.mxu0 0.0
        %1168 = vmatprep.subr.mxu0 0.0
        %1169 = vmatpush2.msra.mxu0 0.0
        %1170 = vmatprep.subr.mxu0 0.0
        %1171 = vmatpush2.msra.mxu0 0.0
        %1172 = vmatprep.subr.mxu0 0.0
        %1173 = vmatpush2.msra.mxu0 0.0
        %1174 = vmatprep.subr.mxu0 0.0
        %1175 = vmatpush2.msra.mxu0 0.0
        %1176 = vmatprep.subr.mxu0 0.0
        %1177 = vmatpush2.msra.mxu0 0.0
        %1178 = vmatprep.subr.mxu0 0.0
        %1179 = vmatpush2.msra.mxu0 0.0
        %1180 = vmatprep.subr.mxu0 0.0
        %1181 = vmatpush2.msra.mxu0 0.0
        %1182 = vmatprep.subr.mxu0 0.0
        %1183 = vmatpush2.msra.mxu0 0.0
        %1184 = vmatprep.subr.mxu0 0.0
        %1185 = vmatpush2.msra.mxu0 0.0
        %1186 = vmatprep.mubr.f32.mxu0 0.0
        %1187 = vmatmul.mubr.f32.gmra.mxu0 %v1120
        %v1188 = vpop.f32.mrf.mxu0
        %v1189 = vadd.f32 0.0, %v1188
        %v1190 = vpop.f32.mrf.mxu0
        %1191 = vdwg.mxu0
        %1193 = vset.pattern.permute.xlu0 0
        %1194 = vperm.xlu0 %1193, %v710
        %v1195 = vpop.permute.xlu0 %1194
        %v1196 = vlaneseq
        %v1197 = vshrl.u32 %v1196, 7
        %v1198 = vsub.s32 %v470, %v1197
        %v1199 = vrot.slane %v1195, %v1198
        %v1200 = vsel %vm518, %v1199, 0
        %1202 = vmatprep.subr.mxu0 0.0
        %1203 = vmatpush1.msra.mxu0 0.0
        %1204 = vmatprep.subr.mxu0 0.0
        %1205 = vmatpush1.msra.mxu0 0.0
        %1206 = vmatprep.subr.mxu0 0.0
        %1207 = vmatpush1.msra.mxu0 0.0
        %1208 = vmatprep.subr.mxu0 0.0
        %1209 = vmatpush1.msra.mxu0 0.0
        %1210 = vmatprep.subr.mxu0 0.0
        %1211 = vmatpush1.msra.mxu0 0.0
        %1212 = vmatprep.subr.mxu0 0.0
        %1213 = vmatpush1.msra.mxu0 0.0
        %1214 = vmatprep.subr.mxu0 0.0
        %1215 = vmatpush1.msra.mxu0 0.0
        %1216 = vmatprep.subr.mxu0 0.0
        %1217 = vmatpush1.msra.mxu0 0.0
        %1218 = vmatprep.subr.mxu0 0.0
        %1219 = vmatpush1.msra.mxu0 0.0
        %1220 = vmatprep.subr.mxu0 0.0
        %1221 = vmatpush1.msra.mxu0 0.0
        %1222 = vmatprep.subr.mxu0 0.0
        %1223 = vmatpush1.msra.mxu0 0.0
        %1224 = vmatprep.subr.mxu0 0.0
        %1225 = vmatpush1.msra.mxu0 0.0
        %1226 = vmatprep.subr.mxu0 0.0
        %1227 = vmatpush1.msra.mxu0 0.0
        %1228 = vmatprep.subr.mxu0 0.0
        %1229 = vmatpush1.msra.mxu0 0.0
        %1230 = vmatprep.subr.mxu0 0.0
        %1231 = vmatpush1.msra.mxu0 0.0
        %1232 = vmatprep.subr.mxu0 0.0
        %1233 = vmatpush1.msra.mxu0 %v252
        %1234 = vmatprep.subr.mxu0 0.0
        %1235 = vmatpush2.msra.mxu0 0.0
        %1236 = vmatprep.subr.mxu0 0.0
        %1237 = vmatpush2.msra.mxu0 0.0
        %1238 = vmatprep.subr.mxu0 0.0
        %1239 = vmatpush2.msra.mxu0 0.0
        %1240 = vmatprep.subr.mxu0 0.0
        %1241 = vmatpush2.msra.mxu0 0.0
        %1242 = vmatprep.subr.mxu0 0.0
        %1243 = vmatpush2.msra.mxu0 0.0
        %1244 = vmatprep.subr.mxu0 0.0
        %1245 = vmatpush2.msra.mxu0 0.0
        %1246 = vmatprep.subr.mxu0 0.0
        %1247 = vmatpush2.msra.mxu0 0.0
        %1248 = vmatprep.subr.mxu0 0.0
        %1249 = vmatpush2.msra.mxu0 0.0
        %1250 = vmatprep.subr.mxu0 0.0
        %1251 = vmatpush2.msra.mxu0 0.0
        %1252 = vmatprep.subr.mxu0 0.0
        %1253 = vmatpush2.msra.mxu0 0.0
        %1254 = vmatprep.subr.mxu0 0.0
        %1255 = vmatpush2.msra.mxu0 0.0
        %1256 = vmatprep.subr.mxu0 0.0
        %1257 = vmatpush2.msra.mxu0 0.0
        %1258 = vmatprep.subr.mxu0 0.0
        %1259 = vmatpush2.msra.mxu0 0.0
        %1260 = vmatprep.subr.mxu0 0.0
        %1261 = vmatpush2.msra.mxu0 0.0
        %1262 = vmatprep.subr.mxu0 0.0
        %1263 = vmatpush2.msra.mxu0 0.0
        %1264 = vmatprep.subr.mxu0 0.0
        %1265 = vmatpush2.msra.mxu0 0.0
        %1266 = vmatprep.mubr.f32.mxu0 0.0
        %1267 = vmatmul.mubr.f32.gmra.mxu0 %v1200
        %v1268 = vpop.f32.mrf.mxu0
        %v1269 = vadd.f32 0.0, %v1268
        %v1270 = vpop.f32.mrf.mxu0
        %1271 = vdwg.mxu0
        %1273 = vset.pattern.permute.xlu0 0
        %1274 = vperm.xlu0 %1273, %v711
        %v1275 = vpop.permute.xlu0 %1274
        %v1276 = vlaneseq
        %v1277 = vshrl.u32 %v1276, 7
        %v1278 = vsub.s32 %v470, %v1277
        %v1279 = vrot.slane %v1275, %v1278
        %v1280 = vsel %vm518, %v1279, 0
        %1282 = vmatprep.subr.mxu0 0.0
        %1283 = vmatpush1.msra.mxu0 0.0
        %1284 = vmatprep.subr.mxu0 0.0
        %1285 = vmatpush1.msra.mxu0 0.0
        %1286 = vmatprep.subr.mxu0 0.0
        %1287 = vmatpush1.msra.mxu0 0.0
        %1288 = vmatprep.subr.mxu0 0.0
        %1289 = vmatpush1.msra.mxu0 0.0
        %1290 = vmatprep.subr.mxu0 0.0
        %1291 = vmatpush1.msra.mxu0 0.0
        %1292 = vmatprep.subr.mxu0 0.0
        %1293 = vmatpush1.msra.mxu0 0.0
        %1294 = vmatprep.subr.mxu0 0.0
        %1295 = vmatpush1.msra.mxu0 0.0
        %1296 = vmatprep.subr.mxu0 0.0
        %1297 = vmatpush1.msra.mxu0 0.0
        %1298 = vmatprep.subr.mxu0 0.0
        %1299 = vmatpush1.msra.mxu0 0.0
        %1300 = vmatprep.subr.mxu0 0.0
        %1301 = vmatpush1.msra.mxu0 0.0
        %1302 = vmatprep.subr.mxu0 0.0
        %1303 = vmatpush1.msra.mxu0 0.0
        %1304 = vmatprep.subr.mxu0 0.0
        %1305 = vmatpush1.msra.mxu0 0.0
        %1306 = vmatprep.subr.mxu0 0.0
        %1307 = vmatpush1.msra.mxu0 0.0
        %1308 = vmatprep.subr.mxu0 0.0
        %1309 = vmatpush1.msra.mxu0 0.0
        %1310 = vmatprep.subr.mxu0 0.0
        %1311 = vmatpush1.msra.mxu0 0.0
        %1312 = vmatprep.subr.mxu0 0.0
        %1313 = vmatpush1.msra.mxu0 %v253
        %1314 = vmatprep.subr.mxu0 0.0
        %1315 = vmatpush2.msra.mxu0 0.0
        %1316 = vmatprep.subr.mxu0 0.0
        %1317 = vmatpush2.msra.mxu0 0.0
        %1318 = vmatprep.subr.mxu0 0.0
        %1319 = vmatpush2.msra.mxu0 0.0
        %1320 = vmatprep.subr.mxu0 0.0
        %1321 = vmatpush2.msra.mxu0 0.0
        %1322 = vmatprep.subr.mxu0 0.0
        %1323 = vmatpush2.msra.mxu0 0.0
        %1324 = vmatprep.subr.mxu0 0.0
        %1325 = vmatpush2.msra.mxu0 0.0
        %1326 = vmatprep.subr.mxu0 0.0
        %1327 = vmatpush2.msra.mxu0 0.0
        %1328 = vmatprep.subr.mxu0 0.0
        %1329 = vmatpush2.msra.mxu0 0.0
        %1330 = vmatprep.subr.mxu0 0.0
        %1331 = vmatpush2.msra.mxu0 0.0
        %1332 = vmatprep.subr.mxu0 0.0
        %1333 = vmatpush2.msra.mxu0 0.0
        %1334 = vmatprep.subr.mxu0 0.0
        %1335 = vmatpush2.msra.mxu0 0.0
        %1336 = vmatprep.subr.mxu0 0.0
        %1337 = vmatpush2.msra.mxu0 0.0
        %1338 = vmatprep.subr.mxu0 0.0
        %1339 = vmatpush2.msra.mxu0 0.0
        %1340 = vmatprep.subr.mxu0 0.0
        %1341 = vmatpush2.msra.mxu0 0.0
        %1342 = vmatprep.subr.mxu0 0.0
        %1343 = vmatpush2.msra.mxu0 0.0
        %1344 = vmatprep.subr.mxu0 0.0
        %1345 = vmatpush2.msra.mxu0 0.0
        %1346 = vmatprep.mubr.f32.mxu0 0.0
        %1347 = vmatmul.mubr.f32.gmra.mxu0 %v1280
        %v1348 = vpop.f32.mrf.mxu0
        %v1349 = vadd.f32 0.0, %v1348
        %v1350 = vpop.f32.mrf.mxu0
        %1351 = vdwg.mxu0
        %v1360 = vrot.slane %v869, 7
        %v1361 = vsel %vm503, %v1360, %v789
        %v1362 = vrot.slane %v949, 6
        %v1363 = vsel %vm505, %v1362, %v1361
        %v1364 = vrot.slane %v1029, 5
        %v1365 = vsel %vm507, %v1364, %v1363
        %v1366 = vrot.slane %v1109, 4
        %v1367 = vsel %vm509, %v1366, %v1365
        %v1368 = vrot.slane %v1189, 3
        %v1369 = vsel %vm511, %v1368, %v1367
        %v1370 = vrot.slane %v1269, 2
        %v1371 = vsel %vm513, %v1370, %v1369
        %v1372 = vrot.slane %v1349, 1
        %v1373 = vsel %vm515, %v1372, %v1371
        %1375 = vst.msk [vmem:[%s244] sm:$0xff] %vm265, %v1373
        %s1376 = sand.u32 %s142, 1
        %s1377 = scalar_lea.sflag [#allocation5], %s1376
        %s1378 = sand.u32 %s142, 1
        %s1379 = smul.addr %s1378, 8
        %s1380 = scalar_lea.vmem [#allocation6], %s1379
        // Predicated region
        $region45: #{tpu_custom_call.1} parent=39 // pred_check
          %p1381 = pneg %p152
        $region46: #{tpu_custom_call.1} parent=39 // pred_check_branch
          %1383 = sbr.rel (%p1381) target = $region48
        $region47: #{tpu_custom_call.1} parent=39 // pred_region
          %s1385 = ssub.s32 128, 128
          %1386 = vsyncadd %s1377, %s1385
          %s1387 = smul.addr %s24, 128
          %s1388 = scalar_lea.hbm %s5, %s1387
          %s1390 = sshll.u32 %s1380, 4
          %s1391 = int_to_ptr.vmem [resolvable:$true] %s1390
          %1393 = dma.vmem_to_hbm [thread:$0]  %s1391, 128, %s1388, %s1377
        $region48: #{tpu_custom_call.1} parent=39 // pred_fallthru
          _
      $region40: #{tpu_custom_call.1} parent=5 // pred_fallthru
        _
      %p1394 = scmp.le.s32.totalorder 2, %s19
      // Predicated region
      $region49: #{tpu_custom_call.1} parent=5 // pred_check
        %p1395 = pneg %p1394
      $region50: #{tpu_custom_call.1} parent=5 // pred_check_branch
        %1397 = sbr.rel (%p1395) target = $region52
      $region51: #{tpu_custom_call.1} parent=5 // pred_region
        %s1398 = ssub.s32 %s19, 2
        // Predicated region
        $region53: #{tpu_custom_call.1} parent=51 // pred_check
          %p1399 = pneg %p158
        $region54: #{tpu_custom_call.1} parent=51 // pred_check_branch
          %1401 = sbr.rel (%p1399) target = $region56
        $region55: #{tpu_custom_call.1} parent=51 // pred_region
          %s1402 = sand.u32 %s143, 1
          %s1403 = scalar_lea.sflag [#allocation5], %s1402
          %s1404 = sand.u32 %s143, 1
          %s1405 = smul.addr %s1404, 8
          %s1406 = scalar_lea.vmem [#allocation6], %s1405
          %1407 = dma.done %s1403, 128
        $region56: #{tpu_custom_call.1} parent=51 // pred_fallthru
          _
      $region52: #{tpu_custom_call.1} parent=5 // pred_fallthru
        _
    $region6: #{tpu_custom_call.1} parent=1 // loop_footer
      %s23 = sadd.s32 1, %s19
    $region7: #{tpu_custom_call.1} parent=1 // loop_footer_branch
      %18 = sbr.rel target = $region3
    $region8: #{tpu_custom_call.1} parent=1 // loop_exit
      _
    %1408 = vsyncpa [#allocation4], 1
    %s1409 = scalar_lea.sflag [#allocation4], 1
    %1410 = vsyncpa %s1409, 1
    %1411 = vsyncpa [#allocation5], 1
    %s1412 = scalar_lea.sflag [#allocation5], 1
    %1413 = vsyncpa %s1412, 1

</llo_original>
